<compile_context>
chip_gen: v5e
topology: v5e:2x2
jax: 0.10.0
libtpu: 0.0.40
codegen_flags: <defaults>
</compile_context>

<pallas_src>
import functools
import math

import numpy as np
import jax
import jax.numpy as jnp
from jax import lax
from jax.experimental import pallas as pl
from jax.experimental.pallas import tpu as pltpu

_MASK_VALUE = -1e30          # large-negative keeps the online softmax NaN-free
_VMEM_LIMIT = 64 * 1024 * 1024   # v5e/v6e (128 MiB parts); re-derive for v7x (64 MiB/TC)


def _pick_tile(dim, target, aligns=(8,)):
    """Largest divisor of `dim` that is <= target and aligned to one of `aligns`
    (tried in preference order); falls back to the full dim, which is always a
    legal block shape."""
    if dim <= target:
        return dim
    for align in aligns:
        for t in range(min(target, dim), align - 1, -1):
            if dim % t == 0 and t % align == 0:
                return t
    # TODO(synk): pad inputs / use masked edge tiles for non-divisible dims
    # instead of falling back to a full-dimension block (can exceed VMEM budget).
    return dim


# ------------------------- tiled MXU matmul (a @ b.T) ------------------------

def _matmul_nt_kernel(a_ref, b_ref, o_ref, acc_ref):
    @pl.when(pl.program_id(2) == 0)
    def _init():
        acc_ref[...] = jnp.zeros_like(acc_ref)

    # contract dim 1 of both operands: a (tm, tk) x b (tn, tk) -> (tm, tn)
    acc_ref[...] += lax.dot_general(a_ref[...], b_ref[...],
                                    (((1,), (1,)), ((), ())),
                                    preferred_element_type=jnp.float32)

    @pl.when(pl.program_id(2) == pl.num_programs(2) - 1)
    def _store():
        o_ref[...] = acc_ref[...].astype(o_ref.dtype)


def matmul_nt(a, b, *, out_dtype=None, tm=512, tn=512, tk=1024):
    """a: (M, K), b: (N, K)  ->  a @ b.T : (M, N).

    b stays in PyTorch Linear layout (out_features, in_features), so no runtime
    weight transpose pass is needed. f32 accumulation in VMEM scratch."""
    M, K = a.shape
    N, K2 = b.shape
    assert K == K2, (a.shape, b.shape)
    out_dtype = a.dtype if out_dtype is None else out_dtype
    tm = _pick_tile(M, tm, aligns=(8,))
    tn = _pick_tile(N, tn, aligns=(128, 8))
    tk = _pick_tile(K, tk, aligns=(128, 8))
    grid = (M // tm, N // tn, K // tk)
    return pl.pallas_call(
        _matmul_nt_kernel,
        out_shape=jax.ShapeDtypeStruct((M, N), out_dtype),
        grid_spec=pltpu.PrefetchScalarGridSpec(
            num_scalar_prefetch=0,
            grid=grid,
            in_specs=[
                pl.BlockSpec((tm, tk), lambda i, j, k: (i, k)),
                pl.BlockSpec((tn, tk), lambda i, j, k: (j, k)),
            ],
            out_specs=pl.BlockSpec((tm, tn), lambda i, j, k: (i, j)),
            scratch_shapes=[pltpu.VMEM((tm, tn), jnp.float32)],
        ),
        compiler_params=pltpu.CompilerParams(
            dimension_semantics=("parallel", "parallel", "arbitrary"),
            vmem_limit_bytes=_VMEM_LIMIT,
        ),
    )(a, b)


# ------------------------- flash cross-attention kernel ----------------------

def _flash_xattn_kernel(n_heads, head_dim, tkv, kv_lens_ref,
                        q_ref, k_ref, v_ref, o_ref,
                        m_sc, l_sc, acc_sc):
    # q_ref: (tq, H*D)   k_ref / v_ref: (tkv, H*D)   o_ref: (tq, H*D)
    # m_sc / l_sc: (tq, H) f32     acc_sc: (tq, H*D) f32
    H, D = n_heads, head_dim
    b = pl.program_id(0)
    ki = pl.program_id(2)

    @pl.when(ki == 0)
    def _init():
        m_sc[...] = jnp.full_like(m_sc, _MASK_VALUE)
        l_sc[...] = jnp.zeros_like(l_sc)
        acc_sc[...] = jnp.zeros_like(acc_sc)

    kv_len = kv_lens_ref[b]

    # Skip kv tiles that are entirely padding (zero MXU work, and the clamped
    # index_map below means they were never DMA'd either).
    @pl.when(ki * tkv < kv_len)
    def _compute():
        # key-padding mask built in-kernel from per-batch kv lengths
        col = ki * tkv + lax.broadcasted_iota(jnp.int32, (1, tkv), 1)
        valid = col < kv_len                                      # (1, tkv)

        q_all = q_ref[...]                                        # (tq,  H*D)
        k_all = k_ref[...]                                        # (tkv, H*D)
        v_all = v_ref[...]                                        # (tkv, H*D)

        # static unroll over heads (lane slices of the lane-dense tiles)
        for h in range(H):
            lo = h * D
            q_h = q_all[:, lo:lo + D]                             # (tq,  D)
            k_h = k_all[:, lo:lo + D]                             # (tkv, D)
            v_h = v_all[:, lo:lo + D]                             # (tkv, D)

            # contract on D without materializing k^T (scale folded into w_q)
            s = lax.dot_general(q_h, k_h, (((1,), (1,)), ((), ())),
                                preferred_element_type=jnp.float32)  # (tq, tkv)
            s = jnp.where(valid, s, _MASK_VALUE)

            m_prev = m_sc[:, h:h + 1]                             # (tq, 1)
            l_prev = l_sc[:, h:h + 1]
            m_new = jnp.maximum(m_prev, jnp.max(s, axis=-1, keepdims=True))
            alpha = jnp.exp(m_prev - m_new)
            p = jnp.exp(s - m_new)                                # (tq, tkv) f32
            l_sc[:, h:h + 1] = alpha * l_prev + jnp.sum(p, axis=-1, keepdims=True)
            acc_sc[:, lo:lo + D] = alpha * acc_sc[:, lo:lo + D] + jnp.dot(
                p.astype(v_h.dtype), v_h, preferred_element_type=jnp.float32)
            m_sc[:, h:h + 1] = m_new

    @pl.when(ki == pl.num_programs(2) - 1)
    def _finalize():
        # assemble all heads into one lane-dense (tq, H*D) value, store once
        pieces = []
        for h in range(H):
            l_h = l_sc[:, h:h + 1]
            # guard against zero-length kv rows (all-padded batch): write zeros
            inv_l = jnp.where(l_h > 0.0,
                              pl.reciprocal(l_h, approx=True),    # EUP reciprocal
                              jnp.zeros_like(l_h))
            pieces.append(acc_sc[:, h * D:(h + 1) * D] * inv_l)
        o_ref[...] = jnp.concatenate(pieces, axis=-1).astype(o_ref.dtype)


# ----------------------------- Python wrappers --------------------------------

def prepare_params(params, n_heads, head_dim, *, compute_dtype=None):
    """One-time parameter prep: fold the softmax scale into w_q, split the fused
    kv_proj weight into contiguous K / V weights, optional bf16 cast."""
    H, D = n_heads, head_dim
    w_q = params["w_q"] * (1.0 / math.sqrt(D))   # (H*D, C), scale folded in
    w_kv = params["w_kv"]                        # (2*H*D, C), rows ordered (h, d, kv)
    w_k = w_kv[0::2]                             # kv == 0 rows -> (H*D, C), order (h, d)
    w_v = w_kv[1::2]                             # kv == 1 rows -> (H*D, C)
    w_out = params["w_out"]                      # (C, H*D)
    if compute_dtype is not None:
        w_q = w_q.astype(compute_dtype)
        w_k = w_k.astype(compute_dtype)
        w_v = w_v.astype(compute_dtype)
        w_out = w_out.astype(compute_dtype)
    return {"w_q": w_q, "w_k": w_k, "w_v": w_v, "w_out": w_out}


def cross_attention_forward(xq, xkv, kv_lens, prepared, n_heads, head_dim,
                            *, tq=256, tkv=512, compute_dtype=None):
    """CrossAttention.forward(xq, xkv, kv_mask) with kv_mask expressed as
    per-batch valid-key lengths (padding mask). Eval mode (dropout identity)."""
    B, Nq, C = xq.shape
    Bk, Nkv, Ck = xkv.shape
    assert (B, C) == (Bk, Ck)
    H, D = n_heads, head_dim
    HD = H * D

    xq2 = xq.reshape(B * Nq, C)
    xkv2 = xkv.reshape(B * Nkv, C)
    if compute_dtype is not None:
        xq2 = xq2.astype(compute_dtype)
        xkv2 = xkv2.astype(compute_dtype)

    # projections (tiled MXU matmuls, no weight transposes); reshapes are free.
    q = matmul_nt(xq2, prepared["w_q"]).reshape(B, Nq, HD)
    k = matmul_nt(xkv2, prepared["w_k"]).reshape(B, Nkv, HD)   # contiguous K slab
    v = matmul_nt(xkv2, prepared["w_v"]).reshape(B, Nkv, HD)   # contiguous V slab

    tq_ = _pick_tile(Nq, tq, aligns=(8,))
    tkv_ = _pick_tile(Nkv, tkv, aligns=(128, 8))   # prefer 128-aligned score lanes
    grid = (B, Nq // tq_, Nkv // tkv_)

    def q_map(b, qi, ki, lens):
        return (b, qi, 0)

    def kv_map(b, qi, ki, lens):
        # clamp to the last block that still contains valid keys so fully
        # padded blocks are never DMA'd (block index repeats -> DMA skipped)
        n_valid_blocks = (lens[b] + tkv_ - 1) // tkv_
        last = jnp.maximum(n_valid_blocks - 1, 0)
        return (b, jnp.minimum(ki, last), 0)

    kernel = functools.partial(_flash_xattn_kernel, H, D, tkv_)

    out = pl.pallas_call(
        kernel,
        out_shape=jax.ShapeDtypeStruct((B, Nq, HD), q.dtype),
        grid_spec=pltpu.PrefetchScalarGridSpec(
            num_scalar_prefetch=1,                          # kv_lens -> SMEM
            grid=grid,
            in_specs=[
                pl.BlockSpec((None, tq_, HD), q_map),       # q  (lane-dense)
                pl.BlockSpec((None, tkv_, HD), kv_map),     # k  (lane-dense)
                pl.BlockSpec((None, tkv_, HD), kv_map),     # v  (lane-dense)
            ],
            out_specs=pl.BlockSpec((None, tq_, HD), q_map), # lane-dense output block
            scratch_shapes=[
                pltpu.VMEM((tq_, H), jnp.float32),          # running max
                pltpu.VMEM((tq_, H), jnp.float32),          # running denominator
                pltpu.VMEM((tq_, HD), jnp.float32),         # running numerator
            ],
        ),
        compiler_params=pltpu.CompilerParams(
            dimension_semantics=("parallel", "parallel", "arbitrary"),
            vmem_limit_bytes=_VMEM_LIMIT,
        ),
    )(kv_lens, q, k, v)

    # 'b n h d -> b n (h d)' is already the stored layout; out_proj back to C.
    out = matmul_nt(out.reshape(B * Nq, HD), prepared["w_out"], out_dtype=xq.dtype)
    return out.reshape(B, Nq, C)


# ------------------------------ reference (pure JAX) --------------------------

def _reference(xq, xkv, kv_lens, params, n_heads, head_dim):
    B, Nq, C = xq.shape
    Nkv = xkv.shape[1]
    H, D = n_heads, head_dim
    q = (xq.reshape(B * Nq, C) @ params["w_q"].T).reshape(B, Nq, H, D)
    kv = (xkv.reshape(B * Nkv, C) @ params["w_kv"].T).reshape(B, Nkv, H, D, 2)
    k, v = kv[..., 0], kv[..., 1]
    q = jnp.transpose(q, (0, 2, 1, 3))
    k = jnp.transpose(k, (0, 2, 1, 3))
    v = jnp.transpose(v, (0, 2, 1, 3))
    s = jnp.einsum("bhqd,bhkd->bhqk", q, k) / math.sqrt(D)
    valid = jnp.arange(Nkv)[None, :] < kv_lens[:, None]
    s = jnp.where(valid[:, None, None, :], s, _MASK_VALUE)
    attn = jax.nn.softmax(s, axis=-1)
    out = jnp.einsum("bhqk,bhkd->bhqd", attn, v)
    out = jnp.transpose(out, (0, 2, 1, 3)).reshape(B * Nq, H * D)
    out = (out @ params["w_out"].T).reshape(B, Nq, C)
    return out


# ----------------------------------- main -------------------------------------

if __name__ == "__main__":
    B, Nq, Nkv, C = 2, 16, 32, 32      # batch, query seq, kv seq, n_feats
    H, D = 4, 16                        # n_heads, head_dim

    key = jax.random.PRNGKey(0)
    k_q, k_kv, k_wq, k_wkv, k_wo = jax.random.split(key, 5)

    xq = jax.random.normal(k_q, (B, Nq, C), dtype=jnp.float32)
    xkv = jax.random.normal(k_kv, (B, Nkv, C), dtype=jnp.float32)
    # per-batch number of valid (non-padded) kv positions  (== kv_mask.sum(-1))
    kv_lens = jnp.array([Nkv, 10], dtype=jnp.int32)

    params = {
        "w_q": 0.05 * jax.random.normal(k_wq, (H * D, C), dtype=jnp.float32),
        "w_kv": 0.05 * jax.random.normal(k_wkv, (2 * H * D, C), dtype=jnp.float32),
        "w_out": 0.05 * jax.random.normal(k_wo, (C, H * D), dtype=jnp.float32),
    }

    ref = _reference(xq, xkv, kv_lens, params, H, D)

    # f32 path: small tiles so the demo exercises the q-tile / kv-tile grid axes
    # and the padded-kv-tile skip (batch 1 has 10 of 32 valid keys).
    prep = prepare_params(params, H, D)
    out = cross_attention_forward(xq, xkv, kv_lens, prep, H, D, tq=8, tkv=16)
    out = jax.block_until_ready(out)
    np.testing.assert_allclose(np.asarray(out), np.asarray(ref), atol=5e-3, rtol=5e-3)

    # bf16 MXU path (production setting: native MXU dtype, f32 softmax/accum)
    prep_bf16 = prepare_params(params, H, D, compute_dtype=jnp.bfloat16)
    out_bf16 = cross_attention_forward(xq, xkv, kv_lens, prep_bf16, H, D,
                                       tq=8, tkv=16, compute_dtype=jnp.bfloat16)
    out_bf16 = jax.block_until_ready(out_bf16)
    np.testing.assert_allclose(np.asarray(out_bf16), np.asarray(ref),
                               atol=5e-2, rtol=5e-2)

    print("KERNEL_OK")
</pallas_src>

<mosaic_0001>
module attributes {stable_mosaic.version = 11 : i64} {
  func.func @_matmul_nt_kernel(%arg0: i32, %arg1: i32, %arg2: i32, %arg3: memref<32x32xf32, #tpu.memory_space<vmem>>, %arg4: memref<64x32xf32, #tpu.memory_space<vmem>>, %arg5: memref<32x64xf32, #tpu.memory_space<vmem>>, %arg6: memref<32x64xf32, #tpu.memory_space<vmem>>) attributes {dimension_semantics = [#tpu.dimension_semantics<parallel>, #tpu.dimension_semantics<parallel>, #tpu.dimension_semantics<arbitrary>], iteration_bounds = array<i64: 1, 1, 1>, scalar_prefetch = 0 : i64, scratch_operands = 1 : i64, tpu.core_type = #tpu.core_type<tc>, window_params = [{transform_indices = @transform_0, window_bounds = array<i64: 32, 32>}, {transform_indices = @transform_1, window_bounds = array<i64: 64, 32>}, {transform_indices = @transform_2, window_bounds = array<i64: 32, 64>}]} {
    %c0_i32 = arith.constant 0 : i32
    %0 = arith.cmpi eq, %arg2, %c0_i32 : i32
    %1 = arith.extui %0 : i1 to i32
    %c0_i32_0 = arith.constant 0 : i32
    %2 = arith.cmpi ne, %1, %c0_i32_0 : i32
    scf.if %2 {
      %cst_10 = arith.constant 0.000000e+00 : f32
      %12 = vector.broadcast %cst_10 : f32 to vector<32x64xf32>
      %c0_11 = arith.constant 0 : index
      %c0_12 = arith.constant 0 : index
      %13 = vector.load %arg6[%c0_11, %c0_12] : memref<32x64xf32, #tpu.memory_space<vmem>>, vector<32x64xf32>
      tpu.vector_store %arg6[%c0_11, %c0_12], %12 {strides = array<i32>} : memref<32x64xf32, #tpu.memory_space<vmem>>, vector<32x64xf32>,
    } else {
    }
    %c0 = arith.constant 0 : index
    %c0_1 = arith.constant 0 : index
    %3 = vector.load %arg6[%c0, %c0_1] : memref<32x64xf32, #tpu.memory_space<vmem>>, vector<32x64xf32>
    %c0_2 = arith.constant 0 : index
    %c0_3 = arith.constant 0 : index
    %4 = vector.load %arg3[%c0_2, %c0_3] : memref<32x32xf32, #tpu.memory_space<vmem>>, vector<32x32xf32>
    %c0_4 = arith.constant 0 : index
    %c0_5 = arith.constant 0 : index
    %5 = vector.load %arg4[%c0_4, %c0_5] : memref<64x32xf32, #tpu.memory_space<vmem>>, vector<64x32xf32>
    %cst = arith.constant dense<0.000000e+00> : vector<32x64xf32>
    %6 = tpu.matmul %4, %5, %cst {dimension_numbers = #tpu.dot_dimension_numbers<[1], [1], [0], [0], [0, 0, 1, 0], [], []>} : vector<32x32xf32>, vector<64x32xf32>, vector<32x64xf32> -> vector<32x64xf32>
    %7 = arith.addf %3, %6 : vector<32x64xf32>
    %c0_6 = arith.constant 0 : index
    %c0_7 = arith.constant 0 : index
    %8 = vector.load %arg6[%c0_6, %c0_7] : memref<32x64xf32, #tpu.memory_space<vmem>>, vector<32x64xf32>
    tpu.vector_store %arg6[%c0_6, %c0_7], %7 {strides = array<i32>} : memref<32x64xf32, #tpu.memory_space<vmem>>, vector<32x64xf32>,
    %c0_i32_8 = arith.constant 0 : i32
    %9 = arith.cmpi eq, %arg2, %c0_i32_8 : i32
    %10 = arith.extui %9 : i1 to i32
    %c0_i32_9 = arith.constant 0 : i32
    %11 = arith.cmpi ne, %10, %c0_i32_9 : i32
    scf.if %11 {
      %c0_10 = arith.constant 0 : index
      %c0_11 = arith.constant 0 : index
      %12 = vector.load %arg6[%c0_10, %c0_11] : memref<32x64xf32, #tpu.memory_space<vmem>>, vector<32x64xf32>
      %c0_12 = arith.constant 0 : index
      %c0_13 = arith.constant 0 : index
      %13 = vector.load %arg5[%c0_12, %c0_13] : memref<32x64xf32, #tpu.memory_space<vmem>>, vector<32x64xf32>
      tpu.vector_store %arg5[%c0_12, %c0_13], %12 {strides = array<i32>} : memref<32x64xf32, #tpu.memory_space<vmem>>, vector<32x64xf32>,
    } else {
    }
    return
  }
  func.func @transform_0(%arg0: i32, %arg1: i32, %arg2: i32) -> (i32, i32) {
    %c0_i32 = arith.constant 0 : i32
    return %arg0, %arg2 : i32, i32
  }
  func.func @transform_1(%arg0: i32, %arg1: i32, %arg2: i32) -> (i32, i32) {
    %c0_i32 = arith.constant 0 : i32
    return %arg1, %arg2 : i32, i32
  }
  func.func @transform_2(%arg0: i32, %arg1: i32, %arg2: i32) -> (i32, i32) {
    %c0_i32 = arith.constant 0 : i32
    return %arg0, %arg1 : i32, i32
  }
}

</mosaic_0001>

<llo_original>
// kernel: tpu_custom_call.1
$region0: #{tpu_custom_call.1}
  #allocation0 [shape = 'u32[]', space=smem, size = 0x4, offset = 0x4, fixed_abs, tag = 'smem constant byte address 0x4 - core index']
  #allocation1 [shape = 'u32[72,128]{1,0:T(1,128)}', space=vmem, size = 0x9000, scoped, tag = 'internal scratch']
  #allocation2 [shape = 'f32[32,64]{1,0:T(8,128)}', space=vmem, size = 0x4000, scoped, tag = 'scratch operand']
  %s0 = inlined_call_operand.vmem [shape: f32[32,32], index: 0, kind: input, shape index: {}]
  %s1 = inlined_call_operand.vmem [shape: f32[64,32], index: 1, kind: input, shape index: {}]
  %s2 = inlined_call_operand.hbm [shape: f32[32,64], index: 2, kind: output, shape index: {}]
  %s3 = sld [smem:[#allocation0]]
  $region26: #{tpu_custom_call.1} parent=0
    _
  %s5 = ssub.s32 1, %s3
  %s6 = scalar_select 0, %s5, %s3
  $region1: #{tpu_custom_call.1} parent=0
    #allocation3 [shape = 'u8[16384]{0}', space=vmem, size = 0x4000, scoped, tag = 'output window, operand 0, single buffered']
    #allocation4 [shape = 's32[1]{0}', space=sflag, size = 0x4, scoped, tag = 'scoped memory for tpu_custom_call.1']
    %7 = vsyncpa [#allocation4], 0
    // Predicated region
    $region2: #{tpu_custom_call.1} parent=1 // pred_check
      _
    $region3: #{tpu_custom_call.1} parent=1 // pred_check_branch
      %9 = sbr.rel (0) target = $region5
    $region4: #{tpu_custom_call.1} parent=1 // pred_region
      _
    $region5: #{tpu_custom_call.1} parent=1 // pred_fallthru
      _
    // Predicated region
    $region6: #{tpu_custom_call.1} parent=1 // pred_check
      _
    $region7: #{tpu_custom_call.1} parent=1 // pred_check_branch
      %11 = sbr.rel (0) target = $region9
    $region8: #{tpu_custom_call.1} parent=1 // pred_region
      _
    $region9: #{tpu_custom_call.1} parent=1 // pred_fallthru
      _
    %p12 = scmp.eq.s32.totalorder 0, 0
    // Predicated region
    $region10: #{tpu_custom_call.1} parent=1 // pred_check
      %p13 = pneg %p12
    $region11: #{tpu_custom_call.1} parent=1 // pred_check_branch
      %15 = sbr.rel (%p13) target = $region13
    $region12: #{tpu_custom_call.1} parent=1 // pred_region
      %vm16 = vcmask 523264
      %17 = vst.msk [vmem:[#allocation2] sm:$0xff] %vm16, 0.0
      %18 = vst.msk [vmem:[#allocation2 + $0x8] sm:$0xff] %vm16, 0.0
      %19 = vst.msk [vmem:[#allocation2 + $0x10] sm:$0xff] %vm16, 0.0
      %20 = vst.msk [vmem:[#allocation2 + $0x18] sm:$0xff] %vm16, 0.0
    $region13: #{tpu_custom_call.1} parent=1 // pred_fallthru
      _
    %v21 = vld [vmem:[#allocation2] sm:$0xff]
    %v22 = vld [vmem:[#allocation2 + $0x8] sm:$0xff]
    %v23 = vld [vmem:[#allocation2 + $0x10] sm:$0xff]
    %v24 = vld [vmem:[#allocation2 + $0x18] sm:$0xff]
    %v25 = vld [vmem:[%s0] sm:$0xff]
    %v26 = vld [vmem:[%s0 + $0x8] sm:$0xff]
    %v27 = vld [vmem:[%s0 + $0x10] sm:$0xff]
    %v28 = vld [vmem:[%s0 + $0x18] sm:$0xff]
    %v29 = vld [vmem:[%s1] sm:$0xff]
    %v30 = vld [vmem:[%s1 + $0x8] sm:$0xff]
    %v31 = vld [vmem:[%s1 + $0x10] sm:$0xff]
    %v32 = vld [vmem:[%s1 + $0x18] sm:$0xff]
    %v33 = vld [vmem:[%s1 + $0x20] sm:$0xff]
    %v34 = vld [vmem:[%s1 + $0x28] sm:$0xff]
    %v35 = vld [vmem:[%s1 + $0x30] sm:$0xff]
    %v36 = vld [vmem:[%s1 + $0x38] sm:$0xff]
    %vm37 = vcmask 261120
    %v39 = vsel %vm37, %v25, 0
    %v42 = vsel %vm37, %v26, 0
    %v45 = vsel %vm37, %v27, 0
    %v48 = vsel %vm37, %v28, 0
    %v51 = vsel %vm37, %v29, 0
    %v54 = vsel %vm37, %v30, 0
    %v57 = vsel %vm37, %v31, 0
    %v60 = vsel %vm37, %v32, 0
    %v63 = vsel %vm37, %v33, 0
    %v66 = vsel %vm37, %v34, 0
    %v69 = vsel %vm37, %v35, 0
    %v72 = vsel %vm37, %v36, 0
    %74 = vmatpush.xpose.msra.mxu0 0.0
    %75 = vmatpush.xpose.msra.mxu0 0.0
    %76 = vmatpush.xpose.msra.mxu0 0.0
    %77 = vmatpush.xpose.msra.mxu0 0.0
    %78 = vmatpush.xpose.msra.mxu0 0.0
    %79 = vmatpush.xpose.msra.mxu0 0.0
    %80 = vmatpush.xpose.msra.mxu0 0.0
    %81 = vmatpush.xpose.msra.mxu0 0.0
    %82 = vmatpush.xpose.msra.mxu0 %v72
    %83 = vmatpush.xpose.msra.mxu0 %v69
    %84 = vmatpush.xpose.msra.mxu0 %v66
    %85 = vmatpush.xpose.msra.mxu0 %v63
    %86 = vmatpush.xpose.msra.mxu0 %v60
    %87 = vmatpush.xpose.msra.mxu0 %v57
    %88 = vmatpush.xpose.msra.mxu0 %v54
    %89 = vmatpush.xpose.msra.mxu0 %v51
    %90 = vmatmul.f32.gmra.mxu0 %v39
    %v91 = vpop.f32.mrf.mxu0
    %v92 = vadd.f32 0.0, %v91
    %93 = vmatmul.f32.gmra.mxu0 %v42
    %v94 = vpop.f32.mrf.mxu0
    %v95 = vadd.f32 0.0, %v94
    %96 = vmatmul.f32.gmra.mxu0 %v45
    %v97 = vpop.f32.mrf.mxu0
    %v98 = vadd.f32 0.0, %v97
    %99 = vmatmul.f32.gmra.mxu0 %v48
    %v100 = vpop.f32.mrf.mxu0
    %v101 = vadd.f32 0.0, %v100
    %102 = vdwg.mxu0
    %v103 = vadd.f32 %v21, %v92
    %v104 = vadd.f32 %v22, %v95
    %v105 = vadd.f32 %v23, %v98
    %v106 = vadd.f32 %v24, %v101
    %vm107 = vcmask 523264
    %108 = vst.msk [vmem:[#allocation2] sm:$0xff] %vm107, %v103
    %109 = vst.msk [vmem:[#allocation2 + $0x8] sm:$0xff] %vm107, %v104
    %110 = vst.msk [vmem:[#allocation2 + $0x10] sm:$0xff] %vm107, %v105
    %111 = vst.msk [vmem:[#allocation2 + $0x18] sm:$0xff] %vm107, %v106
    // Predicated region
    $region14: #{tpu_custom_call.1} parent=1 // pred_check
      %p112 = pneg %p12
    $region15: #{tpu_custom_call.1} parent=1 // pred_check_branch
      %114 = sbr.rel (%p112) target = $region17
    $region16: #{tpu_custom_call.1} parent=1 // pred_region
      %v115 = vld [vmem:[#allocation2] sm:$0xff]
      %v116 = vld [vmem:[#allocation2 + $0x8] sm:$0xff]
      %v117 = vld [vmem:[#allocation2 + $0x10] sm:$0xff]
      %v118 = vld [vmem:[#allocation2 + $0x18] sm:$0xff]
      %119 = vst.msk [vmem:[#allocation3] sm:$0xff] %vm107, %v115
      %120 = vst.msk [vmem:[#allocation3 + $0x8] sm:$0xff] %vm107, %v116
      %121 = vst.msk [vmem:[#allocation3 + $0x10] sm:$0xff] %vm107, %v117
      %122 = vst.msk [vmem:[#allocation3 + $0x18] sm:$0xff] %vm107, %v118
    $region17: #{tpu_custom_call.1} parent=1 // pred_fallthru
      _
    // Predicated region
    $region18: #{tpu_custom_call.1} parent=1 // pred_check
      _
    $region19: #{tpu_custom_call.1} parent=1 // pred_check_branch
      %124 = sbr.rel (0) target = $region21
    $region20: #{tpu_custom_call.1} parent=1 // pred_region
      %126 = vsyncadd [#allocation4], 0
      %s127 = sshll.u32 [#allocation3], 4
      %s128 = int_to_ptr.vmem [resolvable:$true] %s127
      %s129 = sshll.u32 %s2, 4
      %s130 = int_to_ptr.hbm [resolvable:$true] %s129
      %135 = dma.vmem_to_hbm [thread:$0]  %s128, 512, %s130, [#allocation4], 128, 128, 8
    $region21: #{tpu_custom_call.1} parent=1 // pred_fallthru
      _
    // Predicated region
    $region22: #{tpu_custom_call.1} parent=1 // pred_check
      _
    $region23: #{tpu_custom_call.1} parent=1 // pred_check_branch
      %137 = sbr.rel (0) target = $region25
    $region24: #{tpu_custom_call.1} parent=1 // pred_region
      %139 = dma.done [#allocation4], 512
    $region25: #{tpu_custom_call.1} parent=1 // pred_fallthru
      _
    %140 = vsyncpa [#allocation4], 1

</llo_original>
